<compile_context>
chip_gen: v7x
topology: tpu7x:2x2x1
jax: 0.10.0
libtpu: 0.0.40
codegen_flags: <defaults>
</compile_context>

<pallas_src>
import functools

import jax
import jax.numpy as jnp
from jax.experimental import pallas as pl
from jax.experimental.pallas import tpu as pltpu


def _round_up(v, m):
    return -(-v // m) * m


def _channel_attn_kernel(x_ref, w1t_ref, b1_ref, w2t_ref, b2_ref, out_ref,
                         sum_acc, max_acc, *, s_total, s_blk, needs_mask):
    # x_ref:   (n_blk, C, s_blk)  current spatial chunk
    # w1t_ref: (C, H), b1_ref: (1, H), w2t_ref: (H, C), b2_ref: (1, C)
    # out_ref: (n_blk, C)         sigmoid gate for this batch block
    # sum_acc / max_acc: (n_blk, C, s_blk) f32 per-lane partial accumulators
    s_idx = pl.program_id(1)
    last = pl.num_programs(1) - 1

    @pl.when(s_idx == 0)
    def _init():
        sum_acc[...] = jnp.zeros(sum_acc.shape, sum_acc.dtype)
        max_acc[...] = jnp.full(max_acc.shape, -jnp.inf, max_acc.dtype)

    x = x_ref[...].astype(jnp.float32)  # (n_blk, C, s_blk)

    def _accum(x_for_sum, x_for_max):
        # Pure elementwise VPU work -> guaranteed to hide under the HBM DMA.
        sum_acc[...] += x_for_sum
        max_acc[...] = jnp.maximum(max_acc[...], x_for_max)

    if not needs_mask:
        # S % s_blk == 0 (static): no masking anywhere in the hot loop.
        _accum(x, x)
    else:
        # Only the final (partial) S block needs masking; all full blocks use
        # the plain path.
        is_last_blk = s_idx == last

        @pl.when(jnp.logical_not(is_last_blk))
        def _full():
            _accum(x, x)

        @pl.when(is_last_blk)
        def _partial():
            lane = jax.lax.broadcasted_iota(jnp.int32, x.shape, 2)
            valid = (lane + s_idx * s_blk) < s_total
            _accum(jnp.where(valid, x, 0.0), jnp.where(valid, x, -jnp.inf))

    @pl.when(s_idx == last)
    def _finalize():
        # Single cross-lane (XLU) reduce per batch block.
        avg = jnp.sum(sum_acc[...], axis=-1) * (1.0 / s_total)   # (n_blk, C)
        mx = jnp.max(max_acc[...], axis=-1)                      # (n_blk, C)

        def mlp(v):
            h = jnp.dot(v, w1t_ref[...], preferred_element_type=jnp.float32)
            h = jnp.maximum(h + b1_ref[...], 0.0)                # ReLU
            return jnp.dot(h, w2t_ref[...],
                           preferred_element_type=jnp.float32) + b2_ref[...]

        gate = jax.nn.sigmoid(mlp(avg) + mlp(mx))
        # Dropout (eval mode) == identity.
        out_ref[...] = gate.astype(out_ref.dtype)


def _pick_blocks(N, C, S, itemsize, budget_bytes):
    """Pick (n_blk, s_blk) so the streamed bytes fit `budget_bytes`.

    Constraints:
      * n_blk divides N and keeps the (n_blk, C) output block sublane-legal
        (n_blk % 8 == 0 or n_blk == N).
      * prefer >= 2 programs on the parallel batch axis (v7x has 2 TCs).
      * s_blk == S (fully contiguous DMA, no masking) preferred; otherwise a
        lane-dense multiple of 128.
    """
    cands = [d for d in range(1, N + 1)
             if N % d == 0 and (d % 8 == 0 or d == N)]
    multi = [d for d in cands if N // d >= 2]
    if multi:
        cands = multi

    c_pad = _round_up(C, 8)  # sublane padding of the x / accumulator tiles

    def stream_bytes(n_blk, s_blk):
        x_bytes = 2 * n_blk * c_pad * s_blk * itemsize      # double-buffered x
        acc_bytes = 2 * n_blk * c_pad * s_blk * 4            # sum + max (f32)
        return x_bytes + acc_bytes

    # Prefer the full spatial extent per step (one contiguous DMA, no mask).
    for n_blk in sorted(cands, reverse=True):
        if stream_bytes(n_blk, S) <= budget_bytes:
            return n_blk, S

    # Otherwise stream S in lane-dense chunks at the smallest valid n_blk.
    n_blk = min(cands)
    per_lane = 2 * n_blk * c_pad * (itemsize + 4)
    s_blk = max(budget_bytes // max(per_lane, 1), 128)
    s_blk = max((s_blk // 128) * 128, 128)
    s_blk = min(s_blk, max((S // 128) * 128, 128))
    return n_blk, s_blk


def channel_attention(x, w1, b1, w2, b2, *, s_block=None, expand=False):
    """x: (N, C, T, V). Returns the (N, C, 1, 1) sigmoid gate.

    Set expand=True to get the (N, C, T, V) expanded view like the PyTorch
    module's `.expand_as(x)` (prefer expand=False and let the consumer's
    multiply fuse the broadcast).  `s_block` forces a spatial chunk size
    (testing hook); default is auto, VMEM-budget driven.
    """
    N, C, T, V = x.shape
    S = T * V
    x_flat = x.reshape(N, C, S)

    H = w1.shape[0]
    # Pre-transpose weights (glue) so the kernel does plain row-major matmuls.
    w1t = jnp.asarray(w1).T               # (C, H)
    b1r = jnp.asarray(b1).reshape(1, H)
    w2t = jnp.asarray(w2).T               # (H, C)
    b2r = jnp.asarray(b2).reshape(1, C)

    itemsize = jnp.dtype(x.dtype).itemsize

    # ---- Generation-aware VMEM budgeting --------------------------------
    try:
        phys_vmem = int(pltpu.get_tpu_info().vmem_capacity_bytes)
    except Exception:
        phys_vmem = 64 << 20          # conservative (v7x per-TensorCore)
    # v7x (64 MiB phys) -> 32 MiB; v5e/v6e (128 MiB phys) -> 64 MiB.
    base_limit = max(min(phys_vmem // 2, 64 << 20), 16 << 20)

    # Resident weights/biases (constant index_map) — count double-buffered.
    wbytes = 2 * 4 * (_round_up(C, 8) * _round_up(H, 128)
                      + 8 * _round_up(H, 128)
                      + _round_up(H, 8) * _round_up(C, 128)
                      + 8 * _round_up(C, 128))
    headroom = 3 << 20                # Mosaic internal scratch, semaphores, ...
    stream_budget = max(base_limit - wbytes - headroom, 4 << 20)

    n_blk, s_blk = _pick_blocks(N, C, S, itemsize, stream_budget)
    if s_block is not None:           # explicit override (tests)
        s_blk = min(int(s_block), S)
        if s_blk != S:
            s_blk = max((s_blk // 128) * 128, 128)  # keep it lane-dense

    c_pad = _round_up(C, 8)
    stream_bytes = (2 * n_blk * c_pad * s_blk * itemsize
                    + 2 * n_blk * c_pad * s_blk * 4)
    out_buf_bytes = 2 * _round_up(n_blk, 8) * _round_up(C, 128) * 4
    need = stream_bytes + wbytes + out_buf_bytes + headroom
    vmem_limit = int(min(max(base_limit, need), phys_vmem * 9 // 10))

    grid = (N // n_blk, pl.cdiv(S, s_blk))
    needs_mask = (S % s_blk) != 0

    kernel = functools.partial(_channel_attn_kernel, s_total=S, s_blk=s_blk,
                               needs_mask=needs_mask)

    gate = pl.pallas_call(
        kernel,
        out_shape=jax.ShapeDtypeStruct((N, C), jnp.float32),
        grid_spec=pltpu.PrefetchScalarGridSpec(
            num_scalar_prefetch=0,
            grid=grid,
            in_specs=[
                # Streamed input tile: varies along both grid axes.
                pl.BlockSpec((n_blk, C, s_blk), lambda i, s: (i, 0, s)),
                # Weights/biases: constant block index -> resident in VMEM,
                # not re-DMA'd per reduction step.
                pl.BlockSpec((C, H), lambda i, s: (0, 0)),
                pl.BlockSpec((1, H), lambda i, s: (0, 0)),
                pl.BlockSpec((H, C), lambda i, s: (0, 0)),
                pl.BlockSpec((1, C), lambda i, s: (0, 0)),
            ],
            out_specs=pl.BlockSpec((n_blk, C), lambda i, s: (i, 0)),
            scratch_shapes=[
                pltpu.VMEM((n_blk, C, s_blk), jnp.float32),   # per-lane sum
                pltpu.VMEM((n_blk, C, s_blk), jnp.float32),   # per-lane max
            ],
        ),
        compiler_params=pltpu.CompilerParams(
            # Batch axis "parallel" (megacore / v7x 2-TC sharding), spatial
            # reduction axis last and "arbitrary".
            dimension_semantics=("parallel", "arbitrary"),
            vmem_limit_bytes=vmem_limit),
    )(x_flat, w1t, b1r, w2t, b2r)

    gate = gate[:, :, None, None]                      # (N, C, 1, 1)
    if expand:
        return jnp.broadcast_to(gate, (N, C, T, V))
    return gate


def init_params(key, channels, reduction=16):
    hidden = max(channels // reduction, 1)
    k1, k2, k3, k4 = jax.random.split(key, 4)
    # Mimics nn.Linear default init (uniform in +/- 1/sqrt(fan_in)).
    lim1 = 1.0 / (channels ** 0.5)
    lim2 = 1.0 / (hidden ** 0.5)
    w1 = jax.random.uniform(k1, (hidden, channels), jnp.float32, -lim1, lim1)
    b1 = jax.random.uniform(k2, (hidden,), jnp.float32, -lim1, lim1)
    w2 = jax.random.uniform(k3, (channels, hidden), jnp.float32, -lim2, lim2)
    b2 = jax.random.uniform(k4, (channels,), jnp.float32, -lim2, lim2)
    return w1, b1, w2, b2


def _reference_gate(x, w1, b1, w2, b2):
    avg = jnp.mean(x, axis=(2, 3))
    mx = jnp.max(x, axis=(2, 3))

    def mlp(v):
        return jnp.maximum(v @ w1.T + b1, 0.0) @ w2.T + b2

    return jax.nn.sigmoid(mlp(avg) + mlp(mx))[:, :, None, None]


if __name__ == "__main__":
    key = jax.random.PRNGKey(0)
    kx, kp = jax.random.split(key)

    # Primary small example consistent with the module.
    N, C, T, V = 2, 4, 16, 16
    x = jax.random.normal(kx, (N, C, T, V), dtype=jnp.float32)
    w1, b1, w2, b2 = init_params(kp, channels=C, reduction=16)

    gate = channel_attention(x, w1, b1, w2, b2)            # (N, C, 1, 1)
    gate = jax.block_until_ready(gate)

    ref_gate = _reference_gate(x, w1, b1, w2, b2)
    assert gate.shape == (N, C, 1, 1)
    assert jnp.allclose(gate, ref_gate, atol=1e-5, rtol=1e-5)

    # Parity with the module's expanded output shape (view in PyTorch).
    out_full = channel_attention(x, w1, b1, w2, b2, expand=True)
    out_full = jax.block_until_ready(out_full)
    assert out_full.shape == (N, C, T, V)
    assert jnp.allclose(out_full, jnp.broadcast_to(ref_gate, (N, C, T, V)),
                        atol=1e-5, rtol=1e-5)

    # Second small case exercising the multi-step streamed reduction
    # (multiple S blocks + masked partial last block).
    kx2, kp2 = jax.random.split(jax.random.PRNGKey(0), 2)
    N2, C2, T2, V2 = 4, 8, 20, 16                          # S = 320
    x2 = jax.random.normal(kx2, (N2, C2, T2, V2), dtype=jnp.float32)
    p2 = init_params(kp2, channels=C2, reduction=16)
    gate2 = channel_attention(x2, *p2, s_block=128)        # 3 S-blocks, last partial
    gate2 = jax.block_until_ready(gate2)
    ref2 = _reference_gate(x2, *p2)
    assert jnp.allclose(gate2, ref2, atol=1e-5, rtol=1e-5)

    print("KERNEL_OK")
</pallas_src>

<mosaic_0001>
module attributes {stable_mosaic.version = 11 : i64} {
  func.func @_channel_attn_kernel(%arg0: i32, %arg1: i32, %arg2: memref<2x4x256xf32, #tpu.memory_space<vmem>>, %arg3: memref<4x1xf32, #tpu.memory_space<vmem>>, %arg4: memref<1x1xf32, #tpu.memory_space<vmem>>, %arg5: memref<1x4xf32, #tpu.memory_space<vmem>>, %arg6: memref<1x4xf32, #tpu.memory_space<vmem>>, %arg7: memref<2x4xf32, #tpu.memory_space<vmem>>, %arg8: memref<2x4x256xf32, #tpu.memory_space<vmem>>, %arg9: memref<2x4x256xf32, #tpu.memory_space<vmem>>) attributes {dimension_semantics = [#tpu.dimension_semantics<parallel>, #tpu.dimension_semantics<arbitrary>], iteration_bounds = array<i64: 1, 1>, scalar_prefetch = 0 : i64, scratch_operands = 2 : i64, tpu.core_type = #tpu.core_type<tc>, window_params = [{transform_indices = @transform_0, window_bounds = array<i64: 2, 4, 256>}, {pipeline_mode = #tpu.pipeline_mode<synchronous>, transform_indices = @transform_1, window_bounds = array<i64: 4, 1>}, {pipeline_mode = #tpu.pipeline_mode<synchronous>, transform_indices = @transform_2, window_bounds = array<i64: 1, 1>}, {pipeline_mode = #tpu.pipeline_mode<synchronous>, transform_indices = @transform_3, window_bounds = array<i64: 1, 4>}, {pipeline_mode = #tpu.pipeline_mode<synchronous>, transform_indices = @transform_4, window_bounds = array<i64: 1, 4>}, {transform_indices = @transform_5, window_bounds = array<i64: 2, 4>}]} {
    %c0_i32 = arith.constant 0 : i32
    %0 = arith.cmpi eq, %arg1, %c0_i32 : i32
    %1 = arith.extui %0 : i1 to i32
    %c0_i32_0 = arith.constant 0 : i32
    %2 = arith.cmpi ne, %1, %c0_i32_0 : i32
    scf.if %2 {
      %cst = arith.constant 0.000000e+00 : f32
      %13 = vector.broadcast %cst : f32 to vector<2x4x256xf32>
      %c0_17 = arith.constant 0 : index
      %c0_18 = arith.constant 0 : index
      %c0_19 = arith.constant 0 : index
      %14 = vector.load %arg8[%c0_17, %c0_18, %c0_19] : memref<2x4x256xf32, #tpu.memory_space<vmem>>, vector<2x4x256xf32>
      tpu.vector_store %arg8[%c0_17, %c0_18, %c0_19], %13 {strides = array<i32>} : memref<2x4x256xf32, #tpu.memory_space<vmem>>, vector<2x4x256xf32>,
      %cst_20 = arith.constant 0xFF800000 : f32
      %15 = vector.broadcast %cst_20 : f32 to vector<2x4x256xf32>
      %c0_21 = arith.constant 0 : index
      %c0_22 = arith.constant 0 : index
      %c0_23 = arith.constant 0 : index
      %16 = vector.load %arg9[%c0_21, %c0_22, %c0_23] : memref<2x4x256xf32, #tpu.memory_space<vmem>>, vector<2x4x256xf32>
      tpu.vector_store %arg9[%c0_21, %c0_22, %c0_23], %15 {strides = array<i32>} : memref<2x4x256xf32, #tpu.memory_space<vmem>>, vector<2x4x256xf32>,
    } else {
    }
    %c0 = arith.constant 0 : index
    %c0_1 = arith.constant 0 : index
    %c0_2 = arith.constant 0 : index
    %3 = vector.load %arg2[%c0, %c0_1, %c0_2] : memref<2x4x256xf32, #tpu.memory_space<vmem>>, vector<2x4x256xf32>
    %c0_3 = arith.constant 0 : index
    %c0_4 = arith.constant 0 : index
    %c0_5 = arith.constant 0 : index
    %4 = vector.load %arg8[%c0_3, %c0_4, %c0_5] : memref<2x4x256xf32, #tpu.memory_space<vmem>>, vector<2x4x256xf32>
    %5 = arith.addf %4, %3 : vector<2x4x256xf32>
    %c0_6 = arith.constant 0 : index
    %c0_7 = arith.constant 0 : index
    %c0_8 = arith.constant 0 : index
    %6 = vector.load %arg8[%c0_6, %c0_7, %c0_8] : memref<2x4x256xf32, #tpu.memory_space<vmem>>, vector<2x4x256xf32>
    tpu.vector_store %arg8[%c0_6, %c0_7, %c0_8], %5 {strides = array<i32>} : memref<2x4x256xf32, #tpu.memory_space<vmem>>, vector<2x4x256xf32>,
    %c0_9 = arith.constant 0 : index
    %c0_10 = arith.constant 0 : index
    %c0_11 = arith.constant 0 : index
    %7 = vector.load %arg9[%c0_9, %c0_10, %c0_11] : memref<2x4x256xf32, #tpu.memory_space<vmem>>, vector<2x4x256xf32>
    %8 = arith.maximumf %7, %3 : vector<2x4x256xf32>
    %c0_12 = arith.constant 0 : index
    %c0_13 = arith.constant 0 : index
    %c0_14 = arith.constant 0 : index
    %9 = vector.load %arg9[%c0_12, %c0_13, %c0_14] : memref<2x4x256xf32, #tpu.memory_space<vmem>>, vector<2x4x256xf32>
    tpu.vector_store %arg9[%c0_12, %c0_13, %c0_14], %8 {strides = array<i32>} : memref<2x4x256xf32, #tpu.memory_space<vmem>>, vector<2x4x256xf32>,
    %c0_i32_15 = arith.constant 0 : i32
    %10 = arith.cmpi eq, %arg1, %c0_i32_15 : i32
    %11 = arith.extui %10 : i1 to i32
    %c0_i32_16 = arith.constant 0 : i32
    %12 = arith.cmpi ne, %11, %c0_i32_16 : i32
    scf.if %12 {
      %c0_17 = arith.constant 0 : index
      %c0_18 = arith.constant 0 : index
      %c0_19 = arith.constant 0 : index
      %13 = vector.load %arg8[%c0_17, %c0_18, %c0_19] : memref<2x4x256xf32, #tpu.memory_space<vmem>>, vector<2x4x256xf32>
      %cst = arith.constant dense<0.000000e+00> : vector<2x4xf32>
      %14 = vector.multi_reduction <add>, %13, %cst [2] : vector<2x4x256xf32> to vector<2x4xf32>
      %cst_20 = arith.constant 3.906250e-03 : f32
      %15 = vector.broadcast %cst_20 : f32 to vector<2x4xf32>
      %16 = arith.mulf %14, %15 : vector<2x4xf32>
      %c0_21 = arith.constant 0 : index
      %c0_22 = arith.constant 0 : index
      %c0_23 = arith.constant 0 : index
      %17 = vector.load %arg9[%c0_21, %c0_22, %c0_23] : memref<2x4x256xf32, #tpu.memory_space<vmem>>, vector<2x4x256xf32>
      %cst_24 = arith.constant dense<0xFF800000> : vector<2x4xf32>
      %18 = vector.multi_reduction <maximumf>, %17, %cst_24 [2] : vector<2x4x256xf32> to vector<2x4xf32>
      %c0_25 = arith.constant 0 : index
      %c0_26 = arith.constant 0 : index
      %19 = vector.load %arg3[%c0_25, %c0_26] : memref<4x1xf32, #tpu.memory_space<vmem>>, vector<4x1xf32>
      %cst_27 = arith.constant dense<0.000000e+00> : vector<2x1xf32>
      %20 = tpu.matmul %16, %19, %cst_27 {dimension_numbers = #tpu.dot_dimension_numbers<[1], [0], [0], [1], [0, 0, 1, 1], [], []>} : vector<2x4xf32>, vector<4x1xf32>, vector<2x1xf32> -> vector<2x1xf32>
      %c0_28 = arith.constant 0 : index
      %c0_29 = arith.constant 0 : index
      %21 = vector.load %arg4[%c0_28, %c0_29] : memref<1x1xf32, #tpu.memory_space<vmem>>, vector<1x1xf32>
      %22 = vector.broadcast %21 : vector<1x1xf32> to vector<2x1xf32>
      %23 = arith.addf %20, %22 : vector<2x1xf32>
      %cst_30 = arith.constant 0.000000e+00 : f32
      %24 = vector.broadcast %cst_30 : f32 to vector<2x1xf32>
      %25 = arith.maximumf %23, %24 : vector<2x1xf32>
      %c0_31 = arith.constant 0 : index
      %c0_32 = arith.constant 0 : index
      %26 = vector.load %arg5[%c0_31, %c0_32] : memref<1x4xf32, #tpu.memory_space<vmem>>, vector<1x4xf32>
      %cst_33 = arith.constant dense<0.000000e+00> : vector<2x4xf32>
      %27 = tpu.matmul %25, %26, %cst_33 {dimension_numbers = #tpu.dot_dimension_numbers<[1], [0], [0], [1], [0, 0, 1, 1], [], []>} : vector<2x1xf32>, vector<1x4xf32>, vector<2x4xf32> -> vector<2x4xf32>
      %c0_34 = arith.constant 0 : index
      %c0_35 = arith.constant 0 : index
      %28 = vector.load %arg6[%c0_34, %c0_35] : memref<1x4xf32, #tpu.memory_space<vmem>>, vector<1x4xf32>
      %29 = vector.broadcast %28 : vector<1x4xf32> to vector<2x4xf32>
      %30 = arith.addf %27, %29 : vector<2x4xf32>
      %c0_36 = arith.constant 0 : index
      %c0_37 = arith.constant 0 : index
      %31 = vector.load %arg3[%c0_36, %c0_37] : memref<4x1xf32, #tpu.memory_space<vmem>>, vector<4x1xf32>
      %cst_38 = arith.constant dense<0.000000e+00> : vector<2x1xf32>
      %32 = tpu.matmul %18, %31, %cst_38 {dimension_numbers = #tpu.dot_dimension_numbers<[1], [0], [0], [1], [0, 0, 1, 1], [], []>} : vector<2x4xf32>, vector<4x1xf32>, vector<2x1xf32> -> vector<2x1xf32>
      %c0_39 = arith.constant 0 : index
      %c0_40 = arith.constant 0 : index
      %33 = vector.load %arg4[%c0_39, %c0_40] : memref<1x1xf32, #tpu.memory_space<vmem>>, vector<1x1xf32>
      %34 = vector.broadcast %33 : vector<1x1xf32> to vector<2x1xf32>
      %35 = arith.addf %32, %34 : vector<2x1xf32>
      %cst_41 = arith.constant 0.000000e+00 : f32
      %36 = vector.broadcast %cst_41 : f32 to vector<2x1xf32>
      %37 = arith.maximumf %35, %36 : vector<2x1xf32>
      %c0_42 = arith.constant 0 : index
      %c0_43 = arith.constant 0 : index
      %38 = vector.load %arg5[%c0_42, %c0_43] : memref<1x4xf32, #tpu.memory_space<vmem>>, vector<1x4xf32>
      %cst_44 = arith.constant dense<0.000000e+00> : vector<2x4xf32>
      %39 = tpu.matmul %37, %38, %cst_44 {dimension_numbers = #tpu.dot_dimension_numbers<[1], [0], [0], [1], [0, 0, 1, 1], [], []>} : vector<2x1xf32>, vector<1x4xf32>, vector<2x4xf32> -> vector<2x4xf32>
      %c0_45 = arith.constant 0 : index
      %c0_46 = arith.constant 0 : index
      %40 = vector.load %arg6[%c0_45, %c0_46] : memref<1x4xf32, #tpu.memory_space<vmem>>, vector<1x4xf32>
      %41 = vector.broadcast %40 : vector<1x4xf32> to vector<2x4xf32>
      %42 = arith.addf %39, %41 : vector<2x4xf32>
      %43 = arith.addf %30, %42 : vector<2x4xf32>
      %44 = arith.negf %43 : vector<2x4xf32>
      %45 = math.exp %44 : vector<2x4xf32>
      %cst_47 = arith.constant 1.000000e+00 : f32
      %46 = vector.broadcast %cst_47 : f32 to vector<2x4xf32>
      %47 = arith.addf %46, %45 : vector<2x4xf32>
      %48 = arith.divf %46, %47 : vector<2x4xf32>
      %c0_48 = arith.constant 0 : index
      %c0_49 = arith.constant 0 : index
      %49 = vector.load %arg7[%c0_48, %c0_49] : memref<2x4xf32, #tpu.memory_space<vmem>>, vector<2x4xf32>
      tpu.vector_store %arg7[%c0_48, %c0_49], %48 {strides = array<i32>} : memref<2x4xf32, #tpu.memory_space<vmem>>, vector<2x4xf32>,
    } else {
    }
    return
  }
  func.func @transform_0(%arg0: i32, %arg1: i32) -> (i32, i32, i32) {
    %c0_i32 = arith.constant 0 : i32
    %c0_i32_0 = arith.constant 0 : i32
    return %arg0, %c0_i32, %arg1 : i32, i32, i32
  }
  func.func @transform_1(%arg0: i32, %arg1: i32) -> (i32, i32) {
    %c0_i32 = arith.constant 0 : i32
    %c0_i32_0 = arith.constant 0 : i32
    %c0_i32_1 = arith.constant 0 : i32
    return %c0_i32, %c0_i32_0 : i32, i32
  }
  func.func @transform_2(%arg0: i32, %arg1: i32) -> (i32, i32) {
    %c0_i32 = arith.constant 0 : i32
    %c0_i32_0 = arith.constant 0 : i32
    %c0_i32_1 = arith.constant 0 : i32
    return %c0_i32, %c0_i32_0 : i32, i32
  }
  func.func @transform_3(%arg0: i32, %arg1: i32) -> (i32, i32) {
    %c0_i32 = arith.constant 0 : i32
    %c0_i32_0 = arith.constant 0 : i32
    %c0_i32_1 = arith.constant 0 : i32
    return %c0_i32, %c0_i32_0 : i32, i32
  }
  func.func @transform_4(%arg0: i32, %arg1: i32) -> (i32, i32) {
    %c0_i32 = arith.constant 0 : i32
    %c0_i32_0 = arith.constant 0 : i32
    %c0_i32_1 = arith.constant 0 : i32
    return %c0_i32, %c0_i32_0 : i32, i32
  }
  func.func @transform_5(%arg0: i32, %arg1: i32) -> (i32, i32) {
    %c0_i32 = arith.constant 0 : i32
    %c0_i32_0 = arith.constant 0 : i32
    return %arg0, %c0_i32 : i32, i32
  }
}

</mosaic_0001>

<llo_original>
// kernel: tpu_custom_call.1
$region0: #{tpu_custom_call.1}
  #allocation0 [shape = 'u32[]', space=smem, size = 0x4, offset = 0x4, fixed_abs, tag = 'smem constant byte address 0x4 - core index']
  #allocation1 [shape = 'u32[144,128]{1,0:T(1,128)}', space=vmem, size = 0x12000, scoped, tag = 'internal scratch']
  #allocation2 [shape = 'f32[2,4,256]{2,1,0:T(4,128)}', space=vmem, size = 0x2000, scoped, tag = 'scratch operand']
  #allocation3 [shape = 'f32[2,4,256]{2,1,0:T(4,128)}', space=vmem, size = 0x2000, scoped, tag = 'scratch operand']
  #allocation4 [shape = 'f32[1,1]{1,0:T(1,128)S(1)}', space=vmem, size = 0x200, scoped, tag = 'scoped memory for tpu_custom_call.1']
  %s0 = inlined_call_operand.hbm [shape: f32[2,4,256], index: 0, kind: input, shape index: {}]
  %s1 = inlined_call_operand.vmem [shape: f32[4,1], index: 1, kind: input, shape index: {}]
  %s2 = inlined_call_operand.<no memory space> [shape: f32[1,1], index: 2, kind: input, shape index: {}]
  %s3 = inlined_call_operand.vmem [shape: f32[1,4], index: 3, kind: input, shape index: {}]
  %s4 = inlined_call_operand.vmem [shape: f32[1,4], index: 4, kind: input, shape index: {}]
  %s5 = inlined_call_operand.hbm [shape: f32[2,4], index: 5, kind: output, shape index: {}]
  %s6 = sld [smem:[#allocation0]]
  $region42: #{tpu_custom_call.1} parent=0
    _
  %s8 = ssub.s32 1, %s6
  %s9 = scalar_select 0, %s8, %s6
  %v10 = vstv %s2
  %11 = vst [vmem:[#allocation4] sm:$0x1] %v10
  $region1: #{tpu_custom_call.1} parent=0
    #allocation5 [shape = 'u8[8192]{0}', space=vmem, size = 0x2000, scoped, tag = 'input window, operand 0, single buffered']
    #allocation6 [shape = 's32[1]{0}', space=sflag, size = 0x4, scoped, tag = 'scoped memory for tpu_custom_call.1']
    #allocation7 [shape = 's32[1]{0}', space=sflag, size = 0x4, scoped, tag = 'scoped memory for tpu_custom_call.1']
    #allocation8 [shape = 'u8[1024]{0}', space=vmem, size = 0x400, scoped, tag = 'output window, operand 0, single buffered']
    %12 = vsyncpa [#allocation6], 0
    %13 = vsyncpa [#allocation7], 0
    // Predicated region
    $region2: #{tpu_custom_call.1} parent=1 // pred_check
      _
    $region3: #{tpu_custom_call.1} parent=1 // pred_check_branch
      %15 = sbr.rel (0) target = $region5
    $region4: #{tpu_custom_call.1} parent=1 // pred_region
      %s17 = ssub.s32 256, 256
      %18 = vsyncadd [#allocation6], %s17
      %s19 = sshll.u32 [#allocation5], 4
      %s20 = int_to_ptr.vmem [resolvable:$true] %s19
      %25 = dma.hbm_to_vmem [thread:$0]  %s0, 256, %s20, [#allocation6], 128, 128, 8
    $region5: #{tpu_custom_call.1} parent=1 // pred_fallthru
      _
    // Predicated region
    $region6: #{tpu_custom_call.1} parent=1 // pred_check
      _
    $region7: #{tpu_custom_call.1} parent=1 // pred_check_branch
      %27 = sbr.rel (0) target = $region9
    $region8: #{tpu_custom_call.1} parent=1 // pred_region
      _
    $region9: #{tpu_custom_call.1} parent=1 // pred_fallthru
      _
    // Predicated region
    $region10: #{tpu_custom_call.1} parent=1 // pred_check
      _
    $region11: #{tpu_custom_call.1} parent=1 // pred_check_branch
      %29 = sbr.rel (0) target = $region13
    $region12: #{tpu_custom_call.1} parent=1 // pred_region
      _
    $region13: #{tpu_custom_call.1} parent=1 // pred_fallthru
      _
    // Predicated region
    $region14: #{tpu_custom_call.1} parent=1 // pred_check
      _
    $region15: #{tpu_custom_call.1} parent=1 // pred_check_branch
      %31 = sbr.rel (0) target = $region17
    $region16: #{tpu_custom_call.1} parent=1 // pred_region
      _
    $region17: #{tpu_custom_call.1} parent=1 // pred_fallthru
      _
    // Predicated region
    $region18: #{tpu_custom_call.1} parent=1 // pred_check
      _
    $region19: #{tpu_custom_call.1} parent=1 // pred_check_branch
      %33 = sbr.rel (0) target = $region21
    $region20: #{tpu_custom_call.1} parent=1 // pred_region
      _
    $region21: #{tpu_custom_call.1} parent=1 // pred_fallthru
      _
    // Predicated region
    $region22: #{tpu_custom_call.1} parent=1 // pred_check
      _
    $region23: #{tpu_custom_call.1} parent=1 // pred_check_branch
      %35 = sbr.rel (0) target = $region25
    $region24: #{tpu_custom_call.1} parent=1 // pred_region
      %36 = dma.done [#allocation6], 256
    $region25: #{tpu_custom_call.1} parent=1 // pred_fallthru
      _
    %p37 = scmp.eq.s32.totalorder 0, 0
    // Predicated region
    $region26: #{tpu_custom_call.1} parent=1 // pred_check
      %p38 = pneg %p37
    $region27: #{tpu_custom_call.1} parent=1 // pred_check_branch
      %40 = sbr.rel (%p38) target = $region29
    $region28: #{tpu_custom_call.1} parent=1 // pred_region
      %41 = vst [vmem:[#allocation2] sm:$0xff] 0.0
      %42 = vst [vmem:[#allocation2 + $0x8] sm:$0xff] 0.0
      %43 = vst [vmem:[#allocation3] sm:$0xff] -inf
      %44 = vst [vmem:[#allocation3 + $0x8] sm:$0xff] -inf
    $region29: #{tpu_custom_call.1} parent=1 // pred_fallthru
      _
    %v45 = vld [vmem:[#allocation5] sm:$0xff]
    %v46 = vld [vmem:[#allocation5 + $0x8] sm:$0xff]
    %v47 = vld [vmem:[#allocation2] sm:$0xff]
    %v48 = vld [vmem:[#allocation2 + $0x8] sm:$0xff]
    %v49 = vadd.f32 %v47, %v45
    %v50 = vadd.f32 %v48, %v46
    %51 = vst [vmem:[#allocation2] sm:$0xff] %v49
    %52 = vst [vmem:[#allocation2 + $0x8] sm:$0xff] %v50
    %v53 = vld [vmem:[#allocation3] sm:$0xff]
    %v54 = vld [vmem:[#allocation3 + $0x8] sm:$0xff]
    %v55 = vmax.f32 %v53, %v45
    %v56 = vmax.f32 %v54, %v46
    %57 = vst [vmem:[#allocation3] sm:$0xff] %v55
    %58 = vst [vmem:[#allocation3 + $0x8] sm:$0xff] %v56
    // Predicated region
    $region30: #{tpu_custom_call.1} parent=1 // pred_check
      %p59 = pneg %p37
    $region31: #{tpu_custom_call.1} parent=1 // pred_check_branch
      %61 = sbr.rel (%p59) target = $region33
    $region32: #{tpu_custom_call.1} parent=1 // pred_region
      %v62 = vld [vmem:[#allocation2] sm:$0xff]
      %v63 = vld [vmem:[#allocation2 + $0x8] sm:$0xff]
      %v66 = vcombine.high %v62, %v62
      %v67 = vcombine.high %v63, %v63
      %vm70 = vcmask 1043456
      %v71 = vsel %vm70, %v62, 0.0
      %v72 = vsel %vm70, %v66, 0.0
      %v73 = vadd.f32 %v71, %v72
      %74 = vadd.xlane.f32.xlu0 %v73
      %v75 = vpop.xlane.xlu0 %74
      %v76 = vsel %vm70, %v63, 0.0
      %v77 = vsel %vm70, %v67, 0.0
      %v78 = vadd.f32 %v76, %v77
      %79 = vadd.xlane.f32.xlu0 %v78
      %v80 = vpop.xlane.xlu0 %79
      %v81 = vmul.f32 %v75, 0.00390625
      %v82 = vmul.f32 %v80, 0.00390625
      %v83 = vld [vmem:[#allocation3] sm:$0xff]
      %v84 = vld [vmem:[#allocation3 + $0x8] sm:$0xff]
      %v87 = vcombine.high %v83, %v83
      %v88 = vcombine.high %v84, %v84
      %v91 = vsel %vm70, %v83, -inf
      %v92 = vsel %vm70, %v87, -inf
      %v93 = vmax.f32 %v91, %v92
      %94 = vmax.xlane.f32.xlu0 %v93
      %v95 = vpop.xlane.xlu0 %94
      %v96 = vsel %vm70, %v84, -inf
      %v97 = vsel %vm70, %v88, -inf
      %v98 = vmax.f32 %v96, %v97
      %99 = vmax.xlane.f32.xlu0 %v98
      %v100 = vpop.xlane.xlu0 %99
      %v101 = vld [vmem:[%s1] sm:$0xf]
      %v102 = vld [vmem:[#allocation4] sm:$0x1]
      %v104 = vlaneseq
      %v105 = vshrl.u32 %v104, 7
      %v106 = vsub.s32 0, %v105
      %v107 = vrot.slane %v102, %v106
      %v111 = vlaneseq
      %v112 = vand.u32 %v111, 127
      %v113 = vlaneseq
      %v114 = vshrl.u32 %v113, 7
      %v115 = vsub.s32 %v112, %v114
      %v116 = vrot.slane %v81, %v115
      %v117 = vlaneseq
      %v118 = vshrl.u32 %v117, 7
      %v119 = vsub.s32 %v112, %v118
      %v120 = vrot.slane %v82, %v119
      %vm121 = vcmask 1041409
      %v122 = vsel %vm121, %v120, %v116
      %vm123 = vcmask 31744
      %v124 = vsel %vm123, %v122, 0
      %v127 = vsel %vm70, %v101, 0
      %129 = vmatprep.subr.mxu0 0.0
      %130 = vmatpush1.msra.mxu0 %v127
      %131 = vmatprep.subr.mxu0 0.0
      %132 = vmatpush1.msra.mxu0 0.0
      %133 = vmatprep.subr.mxu0 0.0
      %134 = vmatpush1.msra.mxu0 0.0
      %135 = vmatprep.subr.mxu0 0.0
      %136 = vmatpush1.msra.mxu0 0.0
      %137 = vmatprep.subr.mxu0 0.0
      %138 = vmatpush1.msra.mxu0 0.0
      %139 = vmatprep.subr.mxu0 0.0
      %140 = vmatpush1.msra.mxu0 0.0
      %141 = vmatprep.subr.mxu0 0.0
      %142 = vmatpush1.msra.mxu0 0.0
      %143 = vmatprep.subr.mxu0 0.0
      %144 = vmatpush1.msra.mxu0 0.0
      %145 = vmatprep.subr.mxu0 0.0
      %146 = vmatpush1.msra.mxu0 0.0
      %147 = vmatprep.subr.mxu0 0.0
      %148 = vmatpush1.msra.mxu0 0.0
      %149 = vmatprep.subr.mxu0 0.0
      %150 = vmatpush1.msra.mxu0 0.0
      %151 = vmatprep.subr.mxu0 0.0
      %152 = vmatpush1.msra.mxu0 0.0
      %153 = vmatprep.subr.mxu0 0.0
      %154 = vmatpush1.msra.mxu0 0.0
      %155 = vmatprep.subr.mxu0 0.0
      %156 = vmatpush1.msra.mxu0 0.0
      %157 = vmatprep.subr.mxu0 0.0
      %158 = vmatpush1.msra.mxu0 0.0
      %159 = vmatprep.subr.mxu0 0.0
      %160 = vmatpush1.msra.mxu0 0.0
      %161 = vmatprep.subr.mxu0 0.0
      %162 = vmatpush1.msra.mxu0 0.0
      %163 = vmatprep.subr.mxu0 0.0
      %164 = vmatpush1.msra.mxu0 0.0
      %165 = vmatprep.subr.mxu0 0.0
      %166 = vmatpush1.msra.mxu0 0.0
      %167 = vmatprep.subr.mxu0 0.0
      %168 = vmatpush1.msra.mxu0 0.0
      %169 = vmatprep.subr.mxu0 0.0
      %170 = vmatpush1.msra.mxu0 0.0
      %171 = vmatprep.subr.mxu0 0.0
      %172 = vmatpush1.msra.mxu0 0.0
      %173 = vmatprep.subr.mxu0 0.0
      %174 = vmatpush1.msra.mxu0 0.0
      %175 = vmatprep.subr.mxu0 0.0
      %176 = vmatpush1.msra.mxu0 0.0
      %177 = vmatprep.subr.mxu0 0.0
      %178 = vmatpush1.msra.mxu0 0.0
      %179 = vmatprep.subr.mxu0 0.0
      %180 = vmatpush1.msra.mxu0 0.0
      %181 = vmatprep.subr.mxu0 0.0
      %182 = vmatpush1.msra.mxu0 0.0
      %183 = vmatprep.subr.mxu0 0.0
      %184 = vmatpush1.msra.mxu0 0.0
      %185 = vmatprep.subr.mxu0 0.0
      %186 = vmatpush1.msra.mxu0 0.0
      %187 = vmatprep.subr.mxu0 0.0
      %188 = vmatpush1.msra.mxu0 0.0
      %189 = vmatprep.subr.mxu0 0.0
      %190 = vmatpush1.msra.mxu0 0.0
      %191 = vmatprep.subr.mxu0 0.0
      %192 = vmatpush1.msra.mxu0 0.0
      %193 = vmatprep.mubr.f32.mxu0 0.0
      %194 = vmatmul.mubr.f32.gmra.mrb[0].mxu0 %v124
      %v195 = vpop.f32.mrb[0].mxu0
      %v196 = vadd.f32 %v107, %v195
      %v197 = vpop.f32.mrb[0].mxu0
      %198 = vdwg.mxu0
      %v199 = vmax.f32 %v196, 0.0
      %v200 = vld [vmem:[%s3] sm:$0x1]
      %v201 = vld [vmem:[%s4] sm:$0x1]
      %v203 = vlaneseq
      %v204 = vshrl.u32 %v203, 7
      %v205 = vsub.s32 0, %v204
      %v206 = vrot.slane %v201, %v205
      %vm208 = vcmask 7168
      %v210 = vsel %vm208, %v199, 0
      %vm212 = vcmask 1040384
      %v214 = vsel %vm212, %v200, 0
      %216 = vmatprep.subr.mxu0 0.0
      %217 = vmatpush1.msra.mxu0 %v214
      %218 = vmatprep.subr.mxu0 0.0
      %219 = vmatpush1.msra.mxu0 0.0
      %220 = vmatprep.subr.mxu0 0.0
      %221 = vmatpush1.msra.mxu0 0.0
      %222 = vmatprep.subr.mxu0 0.0
      %223 = vmatpush1.msra.mxu0 0.0
      %224 = vmatprep.subr.mxu0 0.0
      %225 = vmatpush1.msra.mxu0 0.0
      %226 = vmatprep.subr.mxu0 0.0
      %227 = vmatpush1.msra.mxu0 0.0
      %228 = vmatprep.subr.mxu0 0.0
      %229 = vmatpush1.msra.mxu0 0.0
      %230 = vmatprep.subr.mxu0 0.0
      %231 = vmatpush1.msra.mxu0 0.0
      %232 = vmatprep.subr.mxu0 0.0
      %233 = vmatpush1.msra.mxu0 0.0
      %234 = vmatprep.subr.mxu0 0.0
      %235 = vmatpush1.msra.mxu0 0.0
      %236 = vmatprep.subr.mxu0 0.0
      %237 = vmatpush1.msra.mxu0 0.0
      %238 = vmatprep.subr.mxu0 0.0
      %239 = vmatpush1.msra.mxu0 0.0
      %240 = vmatprep.subr.mxu0 0.0
      %241 = vmatpush1.msra.mxu0 0.0
      %242 = vmatprep.subr.mxu0 0.0
      %243 = vmatpush1.msra.mxu0 0.0
      %244 = vmatprep.subr.mxu0 0.0
      %245 = vmatpush1.msra.mxu0 0.0
      %246 = vmatprep.subr.mxu0 0.0
      %247 = vmatpush1.msra.mxu0 0.0
      %248 = vmatprep.subr.mxu0 0.0
      %249 = vmatpush1.msra.mxu0 0.0
      %250 = vmatprep.subr.mxu0 0.0
      %251 = vmatpush1.msra.mxu0 0.0
      %252 = vmatprep.subr.mxu0 0.0
      %253 = vmatpush1.msra.mxu0 0.0
      %254 = vmatprep.subr.mxu0 0.0
      %255 = vmatpush1.msra.mxu0 0.0
      %256 = vmatprep.subr.mxu0 0.0
      %257 = vmatpush1.msra.mxu0 0.0
      %258 = vmatprep.subr.mxu0 0.0
      %259 = vmatpush1.msra.mxu0 0.0
      %260 = vmatprep.subr.mxu0 0.0
      %261 = vmatpush1.msra.mxu0 0.0
      %262 = vmatprep.subr.mxu0 0.0
      %263 = vmatpush1.msra.mxu0 0.0
      %264 = vmatprep.subr.mxu0 0.0
      %265 = vmatpush1.msra.mxu0 0.0
      %266 = vmatprep.subr.mxu0 0.0
      %267 = vmatpush1.msra.mxu0 0.0
      %268 = vmatprep.subr.mxu0 0.0
      %269 = vmatpush1.msra.mxu0 0.0
      %270 = vmatprep.subr.mxu0 0.0
      %271 = vmatpush1.msra.mxu0 0.0
      %272 = vmatprep.subr.mxu0 0.0
      %273 = vmatpush1.msra.mxu0 0.0
      %274 = vmatprep.subr.mxu0 0.0
      %275 = vmatpush1.msra.mxu0 0.0
      %276 = vmatprep.subr.mxu0 0.0
      %277 = vmatpush1.msra.mxu0 0.0
      %278 = vmatprep.subr.mxu0 0.0
      %279 = vmatpush1.msra.mxu0 0.0
      %280 = vmatprep.mubr.f32.mxu0 0.0
      %281 = vmatmul.mubr.f32.gmra.mrb[0].mxu0 %v210
      %v282 = vpop.f32.mrb[0].mxu0
      %v283 = vadd.f32 %v206, %v282
      %v284 = vpop.f32.mrb[0].mxu0
      %285 = vdwg.mxu0
      %v288 = vlaneseq
      %v289 = vshrl.u32 %v288, 7
      %v290 = vsub.s32 %v112, %v289
      %v291 = vrot.slane %v95, %v290
      %v292 = vlaneseq
      %v293 = vshrl.u32 %v292, 7
      %v294 = vsub.s32 %v112, %v293
      %v295 = vrot.slane %v100, %v294
      %v296 = vsel %vm121, %v295, %v291
      %v297 = vsel %vm123, %v296, 0
      %299 = vmatprep.subr.mxu0 0.0
      %300 = vmatpush1.msra.mxu0 %v127
      %301 = vmatprep.subr.mxu0 0.0
      %302 = vmatpush1.msra.mxu0 0.0
      %303 = vmatprep.subr.mxu0 0.0
      %304 = vmatpush1.msra.mxu0 0.0
      %305 = vmatprep.subr.mxu0 0.0
      %306 = vmatpush1.msra.mxu0 0.0
      %307 = vmatprep.subr.mxu0 0.0
      %308 = vmatpush1.msra.mxu0 0.0
      %309 = vmatprep.subr.mxu0 0.0
      %310 = vmatpush1.msra.mxu0 0.0
      %311 = vmatprep.subr.mxu0 0.0
      %312 = vmatpush1.msra.mxu0 0.0
      %313 = vmatprep.subr.mxu0 0.0
      %314 = vmatpush1.msra.mxu0 0.0
      %315 = vmatprep.subr.mxu0 0.0
      %316 = vmatpush1.msra.mxu0 0.0
      %317 = vmatprep.subr.mxu0 0.0
      %318 = vmatpush1.msra.mxu0 0.0
      %319 = vmatprep.subr.mxu0 0.0
      %320 = vmatpush1.msra.mxu0 0.0
      %321 = vmatprep.subr.mxu0 0.0
      %322 = vmatpush1.msra.mxu0 0.0
      %323 = vmatprep.subr.mxu0 0.0
      %324 = vmatpush1.msra.mxu0 0.0
      %325 = vmatprep.subr.mxu0 0.0
      %326 = vmatpush1.msra.mxu0 0.0
      %327 = vmatprep.subr.mxu0 0.0
      %328 = vmatpush1.msra.mxu0 0.0
      %329 = vmatprep.subr.mxu0 0.0
      %330 = vmatpush1.msra.mxu0 0.0
      %331 = vmatprep.subr.mxu0 0.0
      %332 = vmatpush1.msra.mxu0 0.0
      %333 = vmatprep.subr.mxu0 0.0
      %334 = vmatpush1.msra.mxu0 0.0
      %335 = vmatprep.subr.mxu0 0.0
      %336 = vmatpush1.msra.mxu0 0.0
      %337 = vmatprep.subr.mxu0 0.0
      %338 = vmatpush1.msra.mxu0 0.0
      %339 = vmatprep.subr.mxu0 0.0
      %340 = vmatpush1.msra.mxu0 0.0
      %341 = vmatprep.subr.mxu0 0.0
      %342 = vmatpush1.msra.mxu0 0.0
      %343 = vmatprep.subr.mxu0 0.0
      %344 = vmatpush1.msra.mxu0 0.0
      %345 = vmatprep.subr.mxu0 0.0
      %346 = vmatpush1.msra.mxu0 0.0
      %347 = vmatprep.subr.mxu0 0.0
      %348 = vmatpush1.msra.mxu0 0.0
      %349 = vmatprep.subr.mxu0 0.0
      %350 = vmatpush1.msra.mxu0 0.0
      %351 = vmatprep.subr.mxu0 0.0
      %352 = vmatpush1.msra.mxu0 0.0
      %353 = vmatprep.subr.mxu0 0.0
      %354 = vmatpush1.msra.mxu0 0.0
      %355 = vmatprep.subr.mxu0 0.0
      %356 = vmatpush1.msra.mxu0 0.0
      %357 = vmatprep.subr.mxu0 0.0
      %358 = vmatpush1.msra.mxu0 0.0
      %359 = vmatprep.subr.mxu0 0.0
      %360 = vmatpush1.msra.mxu0 0.0
      %361 = vmatprep.subr.mxu0 0.0
      %362 = vmatpush1.msra.mxu0 0.0
      %363 = vmatprep.mubr.f32.mxu0 0.0
      %364 = vmatmul.mubr.f32.gmra.mrb[0].mxu0 %v297
      %v365 = vpop.f32.mrb[0].mxu0
      %v366 = vadd.f32 %v107, %v365
      %v367 = vpop.f32.mrb[0].mxu0
      %368 = vdwg.mxu0
      %v369 = vmax.f32 %v366, 0.0
      %v371 = vsel %vm208, %v369, 0
      %373 = vmatprep.subr.mxu0 0.0
      %374 = vmatpush1.msra.mxu0 %v214
      %375 = vmatprep.subr.mxu0 0.0
      %376 = vmatpush1.msra.mxu0 0.0
      %377 = vmatprep.subr.mxu0 0.0
      %378 = vmatpush1.msra.mxu0 0.0
      %379 = vmatprep.subr.mxu0 0.0
      %380 = vmatpush1.msra.mxu0 0.0
      %381 = vmatprep.subr.mxu0 0.0
      %382 = vmatpush1.msra.mxu0 0.0
      %383 = vmatprep.subr.mxu0 0.0
      %384 = vmatpush1.msra.mxu0 0.0
      %385 = vmatprep.subr.mxu0 0.0
      %386 = vmatpush1.msra.mxu0 0.0
      %387 = vmatprep.subr.mxu0 0.0
      %388 = vmatpush1.msra.mxu0 0.0
      %389 = vmatprep.subr.mxu0 0.0
      %390 = vmatpush1.msra.mxu0 0.0
      %391 = vmatprep.subr.mxu0 0.0
      %392 = vmatpush1.msra.mxu0 0.0
      %393 = vmatprep.subr.mxu0 0.0
      %394 = vmatpush1.msra.mxu0 0.0
      %395 = vmatprep.subr.mxu0 0.0
      %396 = vmatpush1.msra.mxu0 0.0
      %397 = vmatprep.subr.mxu0 0.0
      %398 = vmatpush1.msra.mxu0 0.0
      %399 = vmatprep.subr.mxu0 0.0
      %400 = vmatpush1.msra.mxu0 0.0
      %401 = vmatprep.subr.mxu0 0.0
      %402 = vmatpush1.msra.mxu0 0.0
      %403 = vmatprep.subr.mxu0 0.0
      %404 = vmatpush1.msra.mxu0 0.0
      %405 = vmatprep.subr.mxu0 0.0
      %406 = vmatpush1.msra.mxu0 0.0
      %407 = vmatprep.subr.mxu0 0.0
      %408 = vmatpush1.msra.mxu0 0.0
      %409 = vmatprep.subr.mxu0 0.0
      %410 = vmatpush1.msra.mxu0 0.0
      %411 = vmatprep.subr.mxu0 0.0
      %412 = vmatpush1.msra.mxu0 0.0
      %413 = vmatprep.subr.mxu0 0.0
      %414 = vmatpush1.msra.mxu0 0.0
      %415 = vmatprep.subr.mxu0 0.0
      %416 = vmatpush1.msra.mxu0 0.0
      %417 = vmatprep.subr.mxu0 0.0
      %418 = vmatpush1.msra.mxu0 0.0
      %419 = vmatprep.subr.mxu0 0.0
      %420 = vmatpush1.msra.mxu0 0.0
      %421 = vmatprep.subr.mxu0 0.0
      %422 = vmatpush1.msra.mxu0 0.0
      %423 = vmatprep.subr.mxu0 0.0
      %424 = vmatpush1.msra.mxu0 0.0
      %425 = vmatprep.subr.mxu0 0.0
      %426 = vmatpush1.msra.mxu0 0.0
      %427 = vmatprep.subr.mxu0 0.0
      %428 = vmatpush1.msra.mxu0 0.0
      %429 = vmatprep.subr.mxu0 0.0
      %430 = vmatpush1.msra.mxu0 0.0
      %431 = vmatprep.subr.mxu0 0.0
      %432 = vmatpush1.msra.mxu0 0.0
      %433 = vmatprep.subr.mxu0 0.0
      %434 = vmatpush1.msra.mxu0 0.0
      %435 = vmatprep.subr.mxu0 0.0
      %436 = vmatpush1.msra.mxu0 0.0
      %437 = vmatprep.mubr.f32.mxu0 0.0
      %438 = vmatmul.mubr.f32.gmra.mrb[0].mxu0 %v371
      %v439 = vpop.f32.mrb[0].mxu0
      %v440 = vadd.f32 %v206, %v439
      %v441 = vpop.f32.mrb[0].mxu0
      %442 = vdwg.mxu0
      %v443 = vadd.f32 %v283, %v440
      %v444 = vxor.u32 %v443, 2147483648
      %v445 = vmul.f32 %v444, 1.442695
      %v446 = vpow.pop %v445
      %v447 = vadd.f32 %v446, 1.0
      %v448 = vrcp.pop %v447
      %v449 = vmul.f32 1.0, %v448
      %vm450 = vcmask 25600
      %451 = vst.msk [vmem:[#allocation8] sm:$0x3] %vm450, %v449
    $region33: #{tpu_custom_call.1} parent=1 // pred_fallthru
      _
    // Predicated region
    $region34: #{tpu_custom_call.1} parent=1 // pred_check
      _
    $region35: #{tpu_custom_call.1} parent=1 // pred_check_branch
      %453 = sbr.rel (0) target = $region37
    $region36: #{tpu_custom_call.1} parent=1 // pred_region
      %s455 = ssub.s32 32, 32
      %456 = vsyncadd [#allocation7], %s455
      %s458 = sshll.u32 [#allocation8], 4
      %s459 = int_to_ptr.vmem [resolvable:$true] %s458
      %461 = dma.vmem_to_hbm [thread:$0]  %s459, 32, %s5, [#allocation7]
    $region37: #{tpu_custom_call.1} parent=1 // pred_fallthru
      _
    // Predicated region
    $region38: #{tpu_custom_call.1} parent=1 // pred_check
      _
    $region39: #{tpu_custom_call.1} parent=1 // pred_check_branch
      %463 = sbr.rel (0) target = $region41
    $region40: #{tpu_custom_call.1} parent=1 // pred_region
      %464 = dma.done [#allocation7], 32
    $region41: #{tpu_custom_call.1} parent=1 // pred_fallthru
      _
    %465 = vsyncpa [#allocation6], 1
    %466 = vsyncpa [#allocation7], 1

</llo_original>
